<compile_context>
chip_gen: v5e
topology: v5e:2x2
jax: 0.10.0
libtpu: 0.0.40
codegen_flags: <defaults>
</compile_context>

<pallas_src>
import jax
import jax.numpy as jnp
from jax.experimental import pallas as pl
from jax.experimental.pallas import tpu as pltpu

# TODO(synk): the module's `aggregator` is a generic callable and Linear uses a
# sampled config; this kernel fixes aggregator=sum (the doctest case) and takes
# explicit weight/bias tensors.

_ROW_STEPS_TARGET = 8  # aim for >= ~8 grid steps along N (dual-TC + pipelining)


def _round_up(v, m):
    return (v + m - 1) // m * m


def _aggregation_kernel(x_ref, y_ref, w_ref, b_ref, out_ref):
    """out = [x | y2d] @ W + b for one (row-block, H-block) tile.

    x_ref : (bn, Dx)          y_ref : (bn, M*Dy)
    w_ref : (Dx + M*Dy, bh)   b_ref : (1, bh) f32  (= bx + M*by)
    out_ref: (bn, bh)
    """
    # Lane concat of the two small-K activations; single MXU dot (K <= 128).
    xy = jnp.concatenate([x_ref[...], y_ref[...]], axis=-1)
    acc = jnp.dot(xy, w_ref[...], preferred_element_type=jnp.float32)
    out_ref[...] = (acc + b_ref[...]).astype(out_ref.dtype)


def aggregation_forward(x, y, wx, bx, wy, by, *,
                        block_n=1024, block_h=512, out_dtype=None):
    """x: (N, Dx), y: (N, M, Dy) -> (N, H). aggregator = sum over dim=-2.

    Inputs are consumed in their own dtype (pass bf16 from the producer to
    halve read traffic on v5e/v6e/v7x); accumulation is always f32; output is
    emitted in `out_dtype` (default: x.dtype).
    """
    n, dx = x.shape
    n_y, m, dy = y.shape
    assert n == n_y
    dy_w, h = wy.shape
    assert dy_w == dy and wx.shape == (dx, h)

    in_dtype = x.dtype
    out_dtype = in_dtype if out_dtype is None else out_dtype

    # Free contiguous view: fold M into the lane dim (no in-kernel reduce).
    y2d = y.reshape(n, m * dy)
    if y2d.dtype != in_dtype:
        y2d = y2d.astype(in_dtype)  # no-op when producer dtypes already match

    # Combined weight / bias (tiny, one-time):
    #   [x | y2d] @ [wx ; tile(wy, (M,1))] + (bx + M*by)
    w_cat = jnp.concatenate([wx, jnp.tile(wy, (m, 1))], axis=0).astype(in_dtype)
    b_cat = (bx.astype(jnp.float32) + m * by.astype(jnp.float32)).reshape(1, h)
    k_tot = dx + m * dy

    # Row tile: multiple of 8 sublanes, capped near N/8 so the grid keeps
    # several "parallel" steps even at small N; partial edge blocks are masked
    # by Pallas, so no wrapper-side padding / slicing is needed.
    bn = min(block_n, _round_up(pl.cdiv(n, _ROW_STEPS_TARGET), 8))
    if bn >= n:
        bn = n  # single full-extent row block (equal to array dim -> legal)

    # H tile: full H when it fits one block (equal to array dim -> legal),
    # otherwise a lane-dense multiple of 128 (partial last block is masked).
    if h <= block_h:
        bh = h
    else:
        bh = max(128, (block_h // 128) * 128)

    grid = (pl.cdiv(n, bn), pl.cdiv(h, bh))  # H innermost: x/y blocks resident

    return pl.pallas_call(
        _aggregation_kernel,
        out_shape=jax.ShapeDtypeStruct((n, h), out_dtype),
        grid=grid,
        in_specs=[
            pl.BlockSpec((bn, dx), lambda i, j: (i, 0)),      # x rows
            pl.BlockSpec((bn, m * dy), lambda i, j: (i, 0)),  # y rows (2-D view)
            pl.BlockSpec((k_tot, bh), lambda i, j: (0, j)),   # combined weight
            pl.BlockSpec((1, bh), lambda i, j: (0, j)),       # combined bias
        ],
        out_specs=pl.BlockSpec((bn, bh), lambda i, j: (i, j)),
        compiler_params=pltpu.CompilerParams(
            dimension_semantics=("parallel", "parallel")),
    )(x, y2d, w_cat, b_cat)


if __name__ == "__main__":
    # Small shapes consistent with the module's doctest (x: (N, Dx), y: (N, M, Dy)).
    # N is deliberately not tile-aligned to exercise masked partial edge blocks.
    N, M, Dx, Dy, H = 83, 5, 3, 2, 128

    key = jax.random.PRNGKey(0)
    kx, ky, kwx, kwy, kbx, kby = jax.random.split(key, 6)

    x = jax.random.normal(kx, (N, Dx), dtype=jnp.float32)
    y = jax.random.normal(ky, (N, M, Dy), dtype=jnp.float32)

    # Deterministic synthetic Linear parameters (in_features -> H).
    wx = jax.random.normal(kwx, (Dx, H), dtype=jnp.float32) * 0.1
    wy = jax.random.normal(kwy, (Dy, H), dtype=jnp.float32) * 0.1
    bx = jax.random.normal(kbx, (H,), dtype=jnp.float32) * 0.01
    by = jax.random.normal(kby, (H,), dtype=jnp.float32) * 0.01

    out = jax.block_until_ready(aggregation_forward(x, y, wx, bx, wy, by))

    # Pure-JAX reference (original op order from the module).
    ref = x @ wx + bx + jnp.sum(jnp.einsum("nmd,dh->nmh", y, wy) + by, axis=-2)

    assert out.shape == (N, H), out.shape
    assert out.dtype == x.dtype, out.dtype
    max_err = float(jnp.max(jnp.abs(out - ref)))
    assert jnp.allclose(out, ref, atol=1e-4, rtol=1e-4), max_err

    print("KERNEL_OK")
</pallas_src>

<mosaic_0001>
module attributes {stable_mosaic.version = 11 : i64} {
  func.func @_aggregation_kernel(%arg0: i32, %arg1: i32, %arg2: memref<16x3xf32, #tpu.memory_space<vmem>>, %arg3: memref<16x10xf32, #tpu.memory_space<vmem>>, %arg4: memref<13x128xf32, #tpu.memory_space<vmem>>, %arg5: memref<1x128xf32, #tpu.memory_space<vmem>>, %arg6: memref<16x128xf32, #tpu.memory_space<vmem>>) attributes {dimension_semantics = [#tpu.dimension_semantics<parallel>, #tpu.dimension_semantics<parallel>], iteration_bounds = array<i64: 6, 1>, scalar_prefetch = 0 : i64, scratch_operands = 0 : i64, tpu.core_type = #tpu.core_type<tc>, window_params = [{transform_indices = @transform_0, window_bounds = array<i64: 16, 3>}, {transform_indices = @transform_1, window_bounds = array<i64: 16, 10>}, {transform_indices = @transform_2, window_bounds = array<i64: 13, 128>}, {transform_indices = @transform_3, window_bounds = array<i64: 1, 128>}, {transform_indices = @transform_4, window_bounds = array<i64: 16, 128>}]} {
    %c0 = arith.constant 0 : index
    %c0_0 = arith.constant 0 : index
    %0 = vector.load %arg2[%c0, %c0_0] : memref<16x3xf32, #tpu.memory_space<vmem>>, vector<16x3xf32>
    %c0_1 = arith.constant 0 : index
    %c0_2 = arith.constant 0 : index
    %1 = vector.load %arg3[%c0_1, %c0_2] : memref<16x10xf32, #tpu.memory_space<vmem>>, vector<16x10xf32>
    %2 = tpu.concatenate %0, %1 in 1 : vector<16x3xf32>, vector<16x10xf32> -> vector<16x13xf32>
    %c0_3 = arith.constant 0 : index
    %c0_4 = arith.constant 0 : index
    %3 = vector.load %arg4[%c0_3, %c0_4] : memref<13x128xf32, #tpu.memory_space<vmem>>, vector<13x128xf32>
    %cst = arith.constant dense<0.000000e+00> : vector<16x128xf32>
    %4 = tpu.matmul %2, %3, %cst {dimension_numbers = #tpu.dot_dimension_numbers<[1], [0], [0], [1], [0, 0, 1, 1], [], []>} : vector<16x13xf32>, vector<13x128xf32>, vector<16x128xf32> -> vector<16x128xf32>
    %c0_5 = arith.constant 0 : index
    %c0_6 = arith.constant 0 : index
    %5 = vector.load %arg5[%c0_5, %c0_6] : memref<1x128xf32, #tpu.memory_space<vmem>>, vector<1x128xf32>
    %6 = vector.broadcast %5 : vector<1x128xf32> to vector<16x128xf32>
    %7 = arith.addf %4, %6 : vector<16x128xf32>
    %c0_7 = arith.constant 0 : index
    %c0_8 = arith.constant 0 : index
    %8 = vector.load %arg6[%c0_7, %c0_8] : memref<16x128xf32, #tpu.memory_space<vmem>>, vector<16x128xf32>
    tpu.vector_store %arg6[%c0_7, %c0_8], %7 {strides = array<i32>} : memref<16x128xf32, #tpu.memory_space<vmem>>, vector<16x128xf32>,
    return
  }
  func.func @transform_0(%arg0: i32, %arg1: i32) -> (i32, i32) {
    %c0_i32 = arith.constant 0 : i32
    %c0_i32_0 = arith.constant 0 : i32
    return %arg0, %c0_i32 : i32, i32
  }
  func.func @transform_1(%arg0: i32, %arg1: i32) -> (i32, i32) {
    %c0_i32 = arith.constant 0 : i32
    %c0_i32_0 = arith.constant 0 : i32
    return %arg0, %c0_i32 : i32, i32
  }
  func.func @transform_2(%arg0: i32, %arg1: i32) -> (i32, i32) {
    %c0_i32 = arith.constant 0 : i32
    %c0_i32_0 = arith.constant 0 : i32
    return %c0_i32, %arg1 : i32, i32
  }
  func.func @transform_3(%arg0: i32, %arg1: i32) -> (i32, i32) {
    %c0_i32 = arith.constant 0 : i32
    %c0_i32_0 = arith.constant 0 : i32
    return %c0_i32, %arg1 : i32, i32
  }
  func.func @transform_4(%arg0: i32, %arg1: i32) -> (i32, i32) {
    %c0_i32 = arith.constant 0 : i32
    return %arg0, %arg1 : i32, i32
  }
}

</mosaic_0001>

<llo_original>
// kernel: tpu_custom_call.1
$region0: #{tpu_custom_call.1}
  #allocation0 [shape = 'u32[]', space=smem, size = 0x4, offset = 0x4, fixed_abs, tag = 'smem constant byte address 0x4 - core index']
  #allocation1 [shape = 'u32[72,128]{1,0:T(1,128)}', space=vmem, size = 0x9000, scoped, tag = 'internal scratch']
  %s0 = inlined_call_operand.vmem [shape: f32[83,3], index: 0, kind: input, shape index: {}]
  %s1 = inlined_call_operand.vmem [shape: f32[83,10], index: 1, kind: input, shape index: {}]
  %s2 = inlined_call_operand.vmem [shape: f32[13,128], index: 2, kind: input, shape index: {}]
  %s3 = inlined_call_operand.vmem [shape: f32[1,128], index: 3, kind: input, shape index: {}]
  %s4 = inlined_call_operand.hbm [shape: f32[83,128], index: 4, kind: output, shape index: {}]
  %s5 = sld [smem:[#allocation0]]
  $region49: #{tpu_custom_call.1} parent=0
    _
  %s7 = ssub.s32 1, %s5
  %s8 = scalar_select 0, %s7, %s5
  $region1: #{tpu_custom_call.1} parent=0
    #allocation2 [shape = 'u8[16384]{0}', space=vmem, size = 0x4000, scoped, tag = 'output window, operand 0']
    #allocation3 [shape = 's32[2]{0}', space=sflag, size = 0x8, scoped, tag = 'scoped memory for tpu_custom_call.1']
    %9 = vsyncpa [#allocation3], 0
    %s10 = scalar_lea.sflag [#allocation3], 1
    %11 = vsyncpa %s10, 0
    loop: start=0, step=1, limit=8
    $region2: #{tpu_custom_call.1} parent=1 // loop_pre_header
      _
    $region3: #{tpu_custom_call.1} parent=1 // loop_header
      %s13 = sphi 0, %s17
      %p14 = scmp.ge.s32.totalorder %s13, 8
      %s20 = sphi 0, %s32
      %s21 = sphi 0, %s28
      %s22 = sphi 0, %s20
      %s23 = sphi 0, %s21
      %s24 = sphi 0, %s22
      %s25 = sphi 0, %s23
      %s35 = sphi 0, %s37
      %s38 = sphi 0, %s35
      %s39 = sphi 0, %s38
      %s55 = sphi 0, %s39
      %s61 = sphi 0, %s63
      %s64 = sphi 0, %s61
      %s65 = sphi 0, %s64
      %s81 = sphi 0, %s65
      %s87 = sphi 0, %s89
      %s90 = sphi 0, %s87
      %s91 = sphi 0, %s90
      %s107 = sphi 0, %s91
      %s113 = sphi 0, %s115
      %s116 = sphi 0, %s113
      %s117 = sphi 0, %s116
      %s133 = sphi 0, %s117
      %s141 = sphi 0, %s143
      %s144 = sphi 0, %s141
      %s145 = sphi 0, %s144
      %s161 = sphi 0, %s145
    $region4: #{tpu_custom_call.1} parent=1 // loop_header_branch
      %16 = sbr.rel (%p14) target = $region8
    $region5: #{tpu_custom_call.1} parent=1 // loop_body
      %s18 = ssub.s32 %s13, 1
      %s19 = ssub.s32 %s13, 2
      %s26 = sadd.s32 1, %s21
      %p27 = scmp.ge.s32.totalorder %s26, 1
      %s28 = scalar_select %p27, 0, %s26
      %s29 = sadd.s32 1, %s20
      %s30 = scalar_select %p27, %s29, %s20
      %p31 = scmp.ge.s32.totalorder %s30, 6
      %s32 = scalar_select %p31, 0, %s30
      %s33 = ssub.s32 %s20, %s32
      %p34 = scmp.eq.s32.totalorder %s33, 0
      %s36 = sadd.s32 %s35, 1
      %s37 = scalar_select %p34, %s35, %s36
      %p40 = pneg %p34
      %p41 = scmp.eq.s32.totalorder %s13, 5
      %p42 = por %p40, %p41
      %p43 = scmp.ne.s32.totalorder %s35, %s38
      %p44 = scmp.eq.s32.totalorder %s13, 0
      %p45 = por %p43, %p44
      %p46 = scmp.ne.s32.totalorder %s35, %s38
      %p47 = scmp.eq.s32.totalorder %s18, 5
      %p48 = por %p46, %p47
      %p49 = scmp.ne.s32.totalorder %s38, %s39
      %p50 = scmp.eq.s32.totalorder %s18, 0
      %p51 = por %p49, %p50
      %p52 = scmp.ne.s32.totalorder %s38, %s39
      %p53 = scmp.eq.s32.totalorder %s19, 5
      %p54 = por %p52, %p53
      %p56 = scmp.ne.s32.totalorder %s39, %s55
      %p57 = scmp.eq.s32.totalorder %s19, 0
      %p58 = por %p56, %p57
      %s59 = ssub.s32 %s20, %s32
      %p60 = scmp.eq.s32.totalorder %s59, 0
      %s62 = sadd.s32 %s61, 1
      %s63 = scalar_select %p60, %s61, %s62
      %p66 = pneg %p60
      %p67 = scmp.eq.s32.totalorder %s13, 5
      %p68 = por %p66, %p67
      %p69 = scmp.ne.s32.totalorder %s61, %s64
      %p70 = scmp.eq.s32.totalorder %s13, 0
      %p71 = por %p69, %p70
      %p72 = scmp.ne.s32.totalorder %s61, %s64
      %p73 = scmp.eq.s32.totalorder %s18, 5
      %p74 = por %p72, %p73
      %p75 = scmp.ne.s32.totalorder %s64, %s65
      %p76 = scmp.eq.s32.totalorder %s18, 0
      %p77 = por %p75, %p76
      %p78 = scmp.ne.s32.totalorder %s64, %s65
      %p79 = scmp.eq.s32.totalorder %s19, 5
      %p80 = por %p78, %p79
      %p82 = scmp.ne.s32.totalorder %s65, %s81
      %p83 = scmp.eq.s32.totalorder %s19, 0
      %p84 = por %p82, %p83
      %s85 = ssub.s32 %s21, %s28
      %p86 = scmp.eq.s32.totalorder %s85, 0
      %s88 = sadd.s32 %s87, 1
      %s89 = scalar_select %p86, %s87, %s88
      %p92 = pneg %p86
      %p93 = scmp.eq.s32.totalorder %s13, 5
      %p94 = por %p92, %p93
      %p95 = scmp.ne.s32.totalorder %s87, %s90
      %p96 = scmp.eq.s32.totalorder %s13, 0
      %p97 = por %p95, %p96
      %p98 = scmp.ne.s32.totalorder %s87, %s90
      %p99 = scmp.eq.s32.totalorder %s18, 5
      %p100 = por %p98, %p99
      %p101 = scmp.ne.s32.totalorder %s90, %s91
      %p102 = scmp.eq.s32.totalorder %s18, 0
      %p103 = por %p101, %p102
      %p104 = scmp.ne.s32.totalorder %s90, %s91
      %p105 = scmp.eq.s32.totalorder %s19, 5
      %p106 = por %p104, %p105
      %p108 = scmp.ne.s32.totalorder %s91, %s107
      %p109 = scmp.eq.s32.totalorder %s19, 0
      %p110 = por %p108, %p109
      %s111 = ssub.s32 %s21, %s28
      %p112 = scmp.eq.s32.totalorder %s111, 0
      %s114 = sadd.s32 %s113, 1
      %s115 = scalar_select %p112, %s113, %s114
      %p118 = pneg %p112
      %p119 = scmp.eq.s32.totalorder %s13, 5
      %p120 = por %p118, %p119
      %p121 = scmp.ne.s32.totalorder %s113, %s116
      %p122 = scmp.eq.s32.totalorder %s13, 0
      %p123 = por %p121, %p122
      %p124 = scmp.ne.s32.totalorder %s113, %s116
      %p125 = scmp.eq.s32.totalorder %s18, 5
      %p126 = por %p124, %p125
      %p127 = scmp.ne.s32.totalorder %s116, %s117
      %p128 = scmp.eq.s32.totalorder %s18, 0
      %p129 = por %p127, %p128
      %p130 = scmp.ne.s32.totalorder %s116, %s117
      %p131 = scmp.eq.s32.totalorder %s19, 5
      %p132 = por %p130, %p131
      %p134 = scmp.ne.s32.totalorder %s117, %s133
      %p135 = scmp.eq.s32.totalorder %s19, 0
      %p136 = por %p134, %p135
      %s137 = ssub.s32 %s20, %s32
      %s138 = ssub.s32 %s21, %s28
      %s139 = sor.u32 %s137, %s138
      %p140 = scmp.eq.s32.totalorder %s139, 0
      %s142 = sadd.s32 %s141, 1
      %s143 = scalar_select %p140, %s141, %s142
      %p146 = pneg %p140
      %p147 = scmp.eq.s32.totalorder %s13, 5
      %p148 = por %p146, %p147
      %p149 = scmp.ne.s32.totalorder %s141, %s144
      %p150 = scmp.eq.s32.totalorder %s13, 0
      %p151 = por %p149, %p150
      %p152 = scmp.ne.s32.totalorder %s141, %s144
      %p153 = scmp.eq.s32.totalorder %s18, 5
      %p154 = por %p152, %p153
      %p155 = scmp.ne.s32.totalorder %s144, %s145
      %p156 = scmp.eq.s32.totalorder %s18, 0
      %p157 = por %p155, %p156
      %p158 = scmp.ne.s32.totalorder %s144, %s145
      %p159 = scmp.eq.s32.totalorder %s19, 5
      %p160 = por %p158, %p159
      %p162 = scmp.ne.s32.totalorder %s145, %s161
      %p163 = scmp.eq.s32.totalorder %s19, 0
      %p164 = por %p162, %p163
      %p165 = scmp.le.s32.totalorder 1, %s13
      %p166 = scmp.lt.s32.totalorder %s13, 7
      %p167 = pnand %p165, %p166
      %p168 = pneg %p167
      // Predicated region
      $region9: #{tpu_custom_call.1} parent=5 // pred_check
        _
      $region10: #{tpu_custom_call.1} parent=5 // pred_check_branch
        %170 = sbr.rel (%p167) target = $region12
      $region11: #{tpu_custom_call.1} parent=5 // pred_region
        %s171 = ssub.s32 %s13, 1
        // Predicated region
        $region13: #{tpu_custom_call.1} parent=11 // pred_check
          %p172 = pneg %p103
        $region14: #{tpu_custom_call.1} parent=11 // pred_check_branch
          %174 = sbr.rel (%p172) target = $region16
        $region15: #{tpu_custom_call.1} parent=11 // pred_region
          %p175 = scmp.lt.s32.totalorder %s23, 0
          %s176 = scalar_select %p175, %s23, 0
          %s177 = smul.addr %s176, 8
          %s178 = scalar_lea.vmem %s2, %s177
        $region16: #{tpu_custom_call.1} parent=11 // pred_fallthru
          _
        // Predicated region
        $region17: #{tpu_custom_call.1} parent=11 // pred_check
          %p179 = pneg %p129
        $region18: #{tpu_custom_call.1} parent=11 // pred_check_branch
          %181 = sbr.rel (%p179) target = $region20
        $region19: #{tpu_custom_call.1} parent=11 // pred_region
          %p182 = scmp.lt.s32.totalorder %s23, 0
          %s183 = scalar_select %p182, %s23, 0
          %s184 = scalar_lea.vmem %s3, %s183
        $region20: #{tpu_custom_call.1} parent=11 // pred_fallthru
          _
      $region12: #{tpu_custom_call.1} parent=5 // pred_fallthru
        _
      %p185 = scmp.lt.s32.totalorder %s13, 6
      // Predicated region
      $region21: #{tpu_custom_call.1} parent=5 // pred_check
        %p186 = pneg %p185
      $region22: #{tpu_custom_call.1} parent=5 // pred_check_branch
        %188 = sbr.rel (%p186) target = $region24
      $region23: #{tpu_custom_call.1} parent=5 // pred_region
        // Predicated region
        $region25: #{tpu_custom_call.1} parent=23 // pred_check
          %p189 = pneg %p45
        $region26: #{tpu_custom_call.1} parent=23 // pred_check_branch
          %191 = sbr.rel (%p189) target = $region28
        $region27: #{tpu_custom_call.1} parent=23 // pred_region
          %s192 = smul.u32 2, %s20
          %s193 = ssub.s32 11, %s192
          %p194 = scmp.lt.s32.totalorder %s193, 2
          %s195 = scalar_select %p194, %s193, 2
          %s196 = smul.u32 8, %s195
          %p197 = scmp.lt.s32.totalorder %s192, 10
          %s198 = scalar_select %p197, %s192, 10
          %s199 = smul.addr %s198, 8
          %s200 = scalar_lea.vmem %s0, %s199
          %s201 = smul.u32 2, %s20
          %s202 = ssub.s32 11, %s201
          %p203 = scmp.lt.s32.totalorder %s202, 2
          %s204 = scalar_select %p203, %s202, 2
          %s205 = smul.u32 8, %s204
        $region28: #{tpu_custom_call.1} parent=23 // pred_fallthru
          _
        // Predicated region
        $region29: #{tpu_custom_call.1} parent=23 // pred_check
          %p206 = pneg %p71
        $region30: #{tpu_custom_call.1} parent=23 // pred_check_branch
          %208 = sbr.rel (%p206) target = $region32
        $region31: #{tpu_custom_call.1} parent=23 // pred_region
          %s209 = smul.u32 2, %s20
          %s210 = ssub.s32 11, %s209
          %p211 = scmp.lt.s32.totalorder %s210, 2
          %s212 = scalar_select %p211, %s210, 2
          %s213 = smul.u32 8, %s212
          %p214 = scmp.lt.s32.totalorder %s209, 10
          %s215 = scalar_select %p214, %s209, 10
          %s216 = smul.addr %s215, 8
          %s217 = scalar_lea.vmem %s1, %s216
          %s218 = smul.u32 2, %s20
          %s219 = ssub.s32 11, %s218
          %p220 = scmp.lt.s32.totalorder %s219, 2
          %s221 = scalar_select %p220, %s219, 2
          %s222 = smul.u32 8, %s221
        $region32: #{tpu_custom_call.1} parent=23 // pred_fallthru
          _
      $region24: #{tpu_custom_call.1} parent=5 // pred_fallthru
        _
      %p223 = scmp.le.s32.totalorder 1, %s13
      %p224 = scmp.lt.s32.totalorder %s13, 7
      %p225 = pnand %p223, %p224
      %p226 = pneg %p225
      // Predicated region
      $region33: #{tpu_custom_call.1} parent=5 // pred_check
        _
      $region34: #{tpu_custom_call.1} parent=5 // pred_check_branch
        %228 = sbr.rel (%p225) target = $region36
      $region35: #{tpu_custom_call.1} parent=5 // pred_region
        %s229 = ssub.s32 %s13, 1
        %s230 = smul.u32 2, %s22
        %s231 = ssub.s32 11, %s230
        %p232 = scmp.lt.s32.totalorder %s231, 2
        %s233 = scalar_select %p232, %s231, 2
        %s234 = smul.u32 8, %s233
        %p235 = scmp.lt.s32.totalorder %s230, 10
        %s236 = scalar_select %p235, %s230, 10
        %s237 = smul.addr %s236, 8
        %s238 = scalar_lea.vmem %s0, %s237
        %p239 = pneg %p51
        %p240 = pneg %p48
        %s241 = smul.u32 2, %s22
        %s242 = ssub.s32 11, %s241
        %p243 = scmp.lt.s32.totalorder %s242, 2
        %s244 = scalar_select %p243, %s242, 2
        %s245 = smul.u32 8, %s244
        %p246 = scmp.lt.s32.totalorder %s241, 10
        %s247 = scalar_select %p246, %s241, 10
        %s248 = smul.addr %s247, 8
        %s249 = scalar_lea.vmem %s1, %s248
        %p250 = pneg %p77
        %p251 = pneg %p74
        %p252 = scmp.lt.s32.totalorder %s23, 0
        %s253 = scalar_select %p252, %s23, 0
        %s254 = smul.addr %s253, 8
        %s255 = scalar_lea.vmem %s2, %s254
        %p256 = pneg %p103
        %p257 = pneg %p100
        %p258 = scmp.lt.s32.totalorder %s23, 0
        %s259 = scalar_select %p258, %s23, 0
        %s260 = scalar_lea.vmem %s3, %s259
        %p261 = pneg %p129
        %p262 = pneg %p126
        %p263 = pneg %p157
        %p264 = pneg %p154
        %s265 = sand.u32 %s144, 1
        %s266 = scalar_lea.sflag [#allocation3], %s265
        %s267 = sand.u32 %s144, 1
        %s268 = smul.addr %s267, 16
        %s269 = scalar_lea.vmem [#allocation2], %s268
        %s270 = smul.u32 2, %s22
        %s271 = ssub.s32 11, %s270
        %p272 = scmp.lt.s32.totalorder %s271, 2
        %s273 = scalar_select %p272, %s271, 2
        %s274 = smul.u32 8, %s273
        %p275 = scmp.lt.s32.totalorder %s270, 10
        %s276 = scalar_select %p275, %s270, 10
        %s277 = smul.addr %s276, 8
        %s278 = scalar_lea.vmem %s0, %s277
        %s279 = smul.u32 2, %s22
        %s280 = ssub.s32 11, %s279
        %p281 = scmp.lt.s32.totalorder %s280, 2
        %s282 = scalar_select %p281, %s280, 2
        %s283 = smul.u32 8, %s282
        %s284 = smul.u32 2, %s22
        %s285 = ssub.s32 11, %s284
        %p286 = scmp.lt.s32.totalorder %s285, 2
        %s287 = scalar_select %p286, %s285, 2
        %s288 = smul.u32 8, %s287
        %p289 = scmp.lt.s32.totalorder %s284, 10
        %s290 = scalar_select %p289, %s284, 10
        %s291 = smul.addr %s290, 8
        %s292 = scalar_lea.vmem %s1, %s291
        %s293 = smul.u32 2, %s22
        %s294 = ssub.s32 11, %s293
        %p295 = scmp.lt.s32.totalorder %s294, 2
        %s296 = scalar_select %p295, %s294, 2
        %s297 = smul.u32 8, %s296
        %p298 = scmp.lt.s32.totalorder %s23, 0
        %s299 = scalar_select %p298, %s23, 0
        %s300 = smul.addr %s299, 8
        %s301 = scalar_lea.vmem %s2, %s300
        %p302 = scmp.lt.s32.totalorder %s23, 0
        %s303 = scalar_select %p302, %s23, 0
        %s304 = scalar_lea.vmem %s3, %s303
        %s305 = smul.u32 2, %s22
        %s306 = ssub.s32 11, %s305
        %p307 = scmp.lt.s32.totalorder %s306, 2
        %s308 = scalar_select %p307, %s306, 2
        %s309 = smul.u32 8, %s308
        %v310 = vld [vmem:[%s278] sm:$0xff]
        %v311 = vld [vmem:[%s278 + $0x8] sm:$0xff]
        %v312 = vld [vmem:[%s292] sm:$0xff]
        %v313 = vld [vmem:[%s292 + $0x8] sm:$0xff]
        %316 = vrot.lane.b32.xlu0 %v312, 3
        %v317 = vpop.permute.xlu0 %316
        %318 = vrot.lane.b32.xlu0 %v313, 3
        %v319 = vpop.permute.xlu0 %318
        %vm322 = vcmask 23552
        %v323 = vsel %vm322, %v310, %v317
        %v324 = vsel %vm322, %v311, %v319
        %v325 = vld [vmem:[%s301] sm:$0xff]
        %v326 = vld [vmem:[%s301 + $0x8] sm:$0x1f]
        %v327 = vld [vmem:[%s304] sm:$0x1]
        %v329 = vperm.slane %v327, 0
        %vm331 = vcmask 105472
        %v333 = vsel %vm331, %v323, 0
        %v336 = vsel %vm331, %v324, 0
        %vm338 = vcmask 1044480
        %v340 = vsel %vm338, %v326, 0
        %342 = vmatpush.msra.mxu0 0.0
        %343 = vmatpush.msra.mxu0 0.0
        %344 = vmatpush.msra.mxu0 0.0
        %345 = vmatpush.msra.mxu0 0.0
        %346 = vmatpush.msra.mxu0 0.0
        %347 = vmatpush.msra.mxu0 0.0
        %348 = vmatpush.msra.mxu0 0.0
        %349 = vmatpush.msra.mxu0 0.0
        %350 = vmatpush.msra.mxu0 0.0
        %351 = vmatpush.msra.mxu0 0.0
        %352 = vmatpush.msra.mxu0 0.0
        %353 = vmatpush.msra.mxu0 0.0
        %354 = vmatpush.msra.mxu0 0.0
        %355 = vmatpush.msra.mxu0 0.0
        %356 = vmatpush.msra.mxu0 %v340
        %357 = vmatpush.msra.mxu0 %v325
        %358 = vmatmul.f32.gmra.mxu0 %v333
        %v359 = vpop.f32.mrf.mxu0
        %v360 = vadd.f32 %v329, %v359
        %361 = vmatmul.f32.gmra.mxu0 %v336
        %v362 = vpop.f32.mrf.mxu0
        %v363 = vadd.f32 %v329, %v362
        %364 = vdwg.mxu0
        %365 = vst [vmem:[%s269] sm:$0xff] %v360
        %366 = vst [vmem:[%s269 + $0x8] sm:$0xff] %v363
        %s367 = sand.u32 %s144, 1
        %s368 = scalar_lea.sflag [#allocation3], %s367
        %s369 = sand.u32 %s144, 1
        %s370 = smul.addr %s369, 16
        %s371 = scalar_lea.vmem [#allocation2], %s370
        // Predicated region
        $region37: #{tpu_custom_call.1} parent=35 // pred_check
          %p372 = pneg %p154
        $region38: #{tpu_custom_call.1} parent=35 // pred_check_branch
          %374 = sbr.rel (%p372) target = $region40
        $region39: #{tpu_custom_call.1} parent=35 // pred_region
          %s375 = smul.u32 2, %s22
          %s376 = ssub.s32 11, %s375
          %p377 = scmp.lt.s32.totalorder %s376, 2
          %s378 = scalar_select %p377, %s376, 2
          %s379 = smul.u32 8, %s378
          %s380 = ssub.s32 16, %s379
          %s381 = sshll.u32 %s380, 4
          %382 = vsyncadd %s368, %s381
          %p383 = scmp.ne.s32.totalorder 0, %s379
          %s384 = sadd.s32 %s23, %s375
          %s385 = smul.addr %s384, 8
          %s386 = scalar_lea.hbm %s4, %s385
          %s387 = smul.u32 8, %s378
          %s388 = sshll.u32 %s371, 4
          %s389 = int_to_ptr.vmem [resolvable:$true] %s388
          %s390 = sshll.u32 %s386, 4
          %s391 = int_to_ptr.hbm [resolvable:$true] %s390
          %s392 = sshll.u32 %s387, 4
          %396 = dma.vmem_to_hbm [thread:$0]  (%p383), %s389, %s392, %s391, %s368, 128, 128, 8
        $region40: #{tpu_custom_call.1} parent=35 // pred_fallthru
          _
      $region36: #{tpu_custom_call.1} parent=5 // pred_fallthru
        _
      %p397 = scmp.le.s32.totalorder 2, %s13
      // Predicated region
      $region41: #{tpu_custom_call.1} parent=5 // pred_check
        %p398 = pneg %p397
      $region42: #{tpu_custom_call.1} parent=5 // pred_check_branch
        %400 = sbr.rel (%p398) target = $region44
      $region43: #{tpu_custom_call.1} parent=5 // pred_region
        %s401 = ssub.s32 %s13, 2
        // Predicated region
        $region45: #{tpu_custom_call.1} parent=43 // pred_check
          %p402 = pneg %p160
        $region46: #{tpu_custom_call.1} parent=43 // pred_check_branch
          %404 = sbr.rel (%p402) target = $region48
        $region47: #{tpu_custom_call.1} parent=43 // pred_region
          %s405 = sand.u32 %s145, 1
          %s406 = scalar_lea.sflag [#allocation3], %s405
          %s407 = sand.u32 %s145, 1
          %s408 = smul.addr %s407, 16
          %s409 = scalar_lea.vmem [#allocation2], %s408
          %411 = dma.done %s406, 256
        $region48: #{tpu_custom_call.1} parent=43 // pred_fallthru
          _
      $region44: #{tpu_custom_call.1} parent=5 // pred_fallthru
        _
    $region6: #{tpu_custom_call.1} parent=1 // loop_footer
      %s17 = sadd.s32 1, %s13
    $region7: #{tpu_custom_call.1} parent=1 // loop_footer_branch
      %12 = sbr.rel target = $region3
    $region8: #{tpu_custom_call.1} parent=1 // loop_exit
      _
    %412 = vsyncpa [#allocation3], 1
    %s413 = scalar_lea.sflag [#allocation3], 1
    %414 = vsyncpa %s413, 1

</llo_original>
